<compile_context>
chip_gen: v7x
topology: tpu7x:2x2x1
jax: 0.10.0
libtpu: 0.0.40
codegen_flags: <defaults>
</compile_context>

<pallas_src>
import functools
import numpy as np
import jax
import jax.numpy as jnp
from jax import lax
from jax.experimental import pallas as pl
from jax.experimental.pallas import tpu as pltpu


def _round_up(x, m):
    return (x + m - 1) // m * m


# ----------------------------- Pallas fused matmul kernel -----------------------------
# Computes  act( A @ B + bias (+ A_ds @ B_ds) (+ residual) )  with bf16 operands on the
# MXU and an f32 accumulator in VMEM.  Grid = (M/tm, N/tn, K/tk), K innermost/arbitrary.
# The optional (A_ds, B_ds) pair is the fused stage-transition downsample 1x1 conv: its
# full K extent is consumed in a single dot at k==0 (its blocks are k-invariant, so they
# stay resident and are only DMA'd once per (i, j) tile).

def _matmul_kernel(*refs, relu, has_res, has_ds):
    it = iter(refs)
    a_ref, b_ref, bias_ref = next(it), next(it), next(it)
    ads_ref = next(it) if has_ds else None
    wds_ref = next(it) if has_ds else None
    res_ref = next(it) if has_res else None
    o_ref, acc_ref = next(it), next(it)

    k = pl.program_id(2)

    @pl.when(k == 0)
    def _():
        init = jnp.broadcast_to(bias_ref[...].astype(jnp.float32), acc_ref.shape)
        if has_ds:
            init = init + jnp.dot(ads_ref[...], wds_ref[...],
                                  preferred_element_type=jnp.float32)
        acc_ref[...] = init

    acc_ref[...] += jnp.dot(a_ref[...], b_ref[...],
                            preferred_element_type=jnp.float32)

    @pl.when(k == pl.num_programs(2) - 1)
    def _():
        out = acc_ref[...]
        if has_res:
            # Residual is the bf16 activation already stored in HBM; added in f32 here.
            out = out + res_ref[...].astype(jnp.float32)
        if relu:
            out = jnp.maximum(out, 0.0)
        o_ref[...] = out.astype(o_ref.dtype)


@functools.lru_cache(maxsize=1)
def _tile_candidates():
    """Generation-dispatched (K, N) tile candidate lists."""
    kind = ""
    try:
        kind = jax.devices()[0].device_kind.lower()
    except Exception:
        pass
    if "v5 lite" in kind or "v5e" in kind or "v5litepod" in kind:
        # v5e: 4x 128x128 MXU, 1 vst slot, 16 MiB scoped-VMEM default.
        return (256, 128), (128,)
    return (512, 384, 256, 128), (256, 128)


def _pick_tm(m):
    for cand in (256, 128):
        if m >= cand and m % cand == 0:
            return cand, m
    mp = _round_up(max(m, 1), 8)
    if mp <= 512:
        return mp, mp
    return 128, _round_up(m, 128)


def _pick_tile(d, cands):
    for cand in cands:
        if d % cand == 0:
            return cand
    return d  # small / odd dim: single full-extent block (allowed by the tiling rule)


def pallas_matmul(a, b, bias, *, relu=False, residual=None, ds=None,
                  out_dtype=jnp.float32):
    """act((a @ b) + bias (+ ds[0] @ ds[1]) (+ residual)).

    a: (M, K) float (cast to bf16 here), b: (K, N) bf16 pre-packed weight,
    bias: (1, N) f32, residual: optional (M, N), ds: optional (A_ds (M, Kd), W_ds (Kd, N))
    fused downsample branch accumulated in f32 inside the kernel.
    """
    M, K = a.shape
    K2, N = b.shape
    assert K == K2
    tm, Mp = _pick_tm(M)
    k_cands, n_cands = _tile_candidates()
    tk = _pick_tile(K, k_cands)
    tn = _pick_tile(N, n_cands)
    # Keep >= 2 "parallel" grid blocks so both TensorCores of a v7x chip get work.
    if (Mp // tm) * (N // tn) < 2:
        if tn >= 256 and N % (tn // 2) == 0:
            tn //= 2
        elif tm >= 16 and (tm // 2) % 8 == 0 and Mp % (tm // 2) == 0:
            tm //= 2

    a_bf = a.astype(jnp.bfloat16)
    if Mp != M:   # only hit by odd standalone shapes (unit test); never in the model path
        a_bf = jnp.pad(a_bf, ((0, Mp - M), (0, 0)))
    b_bf = b.astype(jnp.bfloat16)
    bias_f = bias.astype(jnp.float32).reshape(1, N)

    operands = [a_bf, b_bf, bias_f]
    in_specs = [
        pl.BlockSpec((tm, tk), lambda i, j, k: (i, k)),
        pl.BlockSpec((tk, tn), lambda i, j, k: (k, j)),
        pl.BlockSpec((1, tn), lambda i, j, k: (0, j)),
    ]

    has_ds = ds is not None
    Kd = 0
    if has_ds:
        a_ds, w_ds = ds
        Kd = a_ds.shape[1]
        assert a_ds.shape[0] == M and w_ds.shape == (Kd, N)
        ads_bf = a_ds.astype(jnp.bfloat16)
        if Mp != M:
            ads_bf = jnp.pad(ads_bf, ((0, Mp - M), (0, 0)))
        operands += [ads_bf, w_ds.astype(jnp.bfloat16)]
        in_specs += [pl.BlockSpec((tm, Kd), lambda i, j, k: (i, 0)),
                     pl.BlockSpec((Kd, tn), lambda i, j, k: (0, j))]

    has_res = residual is not None
    if has_res:
        r = residual.astype(jnp.bfloat16)
        if Mp != M:
            r = jnp.pad(r, ((0, Mp - M), (0, 0)))
        operands.append(r)
        in_specs.append(pl.BlockSpec((tm, tn), lambda i, j, k: (i, j)))

    out_itemsize = jnp.dtype(out_dtype).itemsize
    n_blocks, m_blocks = N // tn, Mp // tm
    flops = 2 * M * K * N + (2 * M * Kd * N if has_ds else 0)
    bytes_accessed = (Mp * K * 2) * n_blocks + (K * N * 2) * m_blocks \
        + Mp * N * out_itemsize + N * 4
    if has_res:
        bytes_accessed += Mp * N * 2
    if has_ds:
        bytes_accessed += (Mp * Kd * 2) * n_blocks + (Kd * N * 2) * m_blocks

    out = pl.pallas_call(
        functools.partial(_matmul_kernel, relu=relu, has_res=has_res, has_ds=has_ds),
        out_shape=jax.ShapeDtypeStruct((Mp, N), out_dtype),
        grid_spec=pltpu.PrefetchScalarGridSpec(
            num_scalar_prefetch=0,
            grid=(Mp // tm, N // tn, K // tk),
            in_specs=in_specs,
            out_specs=pl.BlockSpec((tm, tn), lambda i, j, k: (i, j)),
            scratch_shapes=[pltpu.VMEM((tm, tn), jnp.float32)],
        ),
        compiler_params=pltpu.CompilerParams(
            dimension_semantics=("parallel", "parallel", "arbitrary")),
        cost_estimate=pl.CostEstimate(flops=int(flops), transcendentals=0,
                                      bytes_accessed=int(bytes_accessed)),
    )(*operands)
    if Mp != M:
        out = out[:M]
    return out


# ----------------------------- fused fc(2048->256)+ReLU + heads(256->14) ---------------
# M is the batch size (tiny), so this is a single pallas_call with full-extent blocks:
# no M padding, no output slicing, no intermediate HBM round trip of the 256-d features.

def _fc_heads_kernel(x_ref, w1_ref, b1_ref, w2_ref, b2_ref, o_ref):
    h = jnp.dot(x_ref[...], w1_ref[...], preferred_element_type=jnp.float32)
    h = jnp.maximum(h + b1_ref[...], 0.0)
    logits = jnp.dot(h.astype(jnp.bfloat16), w2_ref[...],
                     preferred_element_type=jnp.float32) + b2_ref[...]
    o_ref[...] = logits


def fc_heads(feats, p_fc, p_heads):
    M, F = feats.shape
    Hdim = p_fc['w'].shape[1]
    n_out = p_heads['w'].shape[1]
    cost = pl.CostEstimate(
        flops=2 * M * (F * Hdim + Hdim * n_out), transcendentals=0,
        bytes_accessed=int(M * F * 2 + F * Hdim * 2 + Hdim * n_out * 2
                           + (Hdim + n_out) * 4 + M * n_out * 4))
    return pl.pallas_call(
        _fc_heads_kernel,
        out_shape=jax.ShapeDtypeStruct((M, n_out), jnp.float32),
        grid_spec=pltpu.PrefetchScalarGridSpec(
            num_scalar_prefetch=0,
            grid=(1,),
            in_specs=[pl.BlockSpec((M, F), lambda i: (0, 0)),
                      pl.BlockSpec(tuple(p_fc['w'].shape), lambda i: (0, 0)),
                      pl.BlockSpec(tuple(p_fc['b'].shape), lambda i: (0, 0)),
                      pl.BlockSpec(tuple(p_heads['w'].shape), lambda i: (0, 0)),
                      pl.BlockSpec(tuple(p_heads['b'].shape), lambda i: (0, 0))],
            out_specs=pl.BlockSpec((M, n_out), lambda i: (0, 0)),
        ),
        compiler_params=pltpu.CompilerParams(dimension_semantics=("arbitrary",)),
        cost_estimate=cost,
    )(feats.astype(jnp.bfloat16), p_fc['w'], p_fc['b'], p_heads['w'], p_heads['b'])


# ----------------------------- conv (NHWC) -> Pallas matmul ---------------------------

def conv_bn(x, cp, *, stride=1, relu=True, residual=None, ds=None,
            out_dtype=jnp.bfloat16):
    """x: (N,H,W,Cin) NHWC (bf16).  cp: dict(w=(kh*kw*Cin, Cout) bf16, b=(1, Cout) f32).
    Conv + folded BatchNorm + optional fused downsample branch / residual-add / ReLU."""
    n, h, w_, cin = x.shape
    kk = cp['w'].shape[0] // cin          # kh*kw (static)
    ksz = int(round(kk ** 0.5))
    cout = cp['w'].shape[1]

    if ksz == 1:
        # 1x1 fast path: no im2col, just a (strided) reshape of the NHWC activation.
        # TODO(synk): the stride-2 decimation could be folded into the A-side index_map.
        xs = x if stride == 1 else x[:, ::stride, ::stride, :]
        ho, wo = xs.shape[1], xs.shape[2]
        a = xs.reshape(n * ho * wo, cin)
    else:
        pad = (ksz - 1) // 2
        xp = jnp.pad(x, ((0, 0), (pad, pad), (pad, pad), (0, 0)))
        ho = (h + 2 * pad - ksz) // stride + 1
        wo = (w_ + 2 * pad - ksz) // stride + 1
        # NHWC im2col: concat kh*kw shifted (strided) views along the channel (lane) axis.
        # Feature order = (kh, kw, Cin), matching the packed weight layout.
        # TODO(synk): replace with in-kernel implicit GEMM to avoid the kk-times expanded
        # bf16 activation in HBM.
        cols = [xp[:, i:i + stride * ho:stride, j:j + stride * wo:stride, :]
                for i in range(ksz) for j in range(ksz)]
        a = jnp.concatenate(cols, axis=-1).reshape(n * ho * wo, kk * cin)

    res2d = None if residual is None else residual.reshape(n * ho * wo, cout)
    out = pallas_matmul(a, cp['w'], cp['b'], relu=relu, residual=res2d, ds=ds,
                        out_dtype=out_dtype)
    return out.reshape(n, ho, wo, cout)


# ----------------------------- ResNet-50 definition ------------------------------

_RESNET50_CFG = [(64, 3, 1), (128, 4, 2), (256, 6, 2), (512, 3, 2)]
_LANE = 128   # pad narrow Cout up to this so every matmul's N is lane-dense


def init_params(key):
    """Raw PyTorch-style parameters (conv weights, BN stats, linear weights)."""
    keys = iter(jax.random.split(key, 128))

    def conv_w(cout, cin, kh, kw):
        fan_in = cin * kh * kw
        return jax.random.normal(next(keys), (cout, cin, kh, kw),
                                 jnp.float32) * np.sqrt(2.0 / fan_in)

    def bn_p(c):
        return dict(gamma=jnp.ones((c,), jnp.float32),
                    beta=jnp.zeros((c,), jnp.float32),
                    mean=jnp.zeros((c,), jnp.float32),
                    var=jnp.ones((c,), jnp.float32))

    def linear_p(cin, cout):
        bound = 1.0 / np.sqrt(cin)
        return dict(
            w=jax.random.uniform(next(keys), (cout, cin), jnp.float32, -bound, bound),
            b=jax.random.uniform(next(keys), (cout,), jnp.float32, -bound, bound))

    params = dict(conv1=conv_w(64, 3, 7, 7), bn1=bn_p(64), layers=[])
    in_c = 64
    for width, n_blocks, stride in _RESNET50_CFG:
        out_c = width * 4
        blocks = []
        for bi in range(n_blocks):
            s = stride if bi == 0 else 1
            blk = dict(conv1=conv_w(width, in_c, 1, 1), bn1=bn_p(width),
                       conv2=conv_w(width, width, 3, 3), bn2=bn_p(width),
                       conv3=conv_w(out_c, width, 1, 1), bn3=bn_p(out_c))
            if s != 1 or in_c != out_c:
                blk['down_conv'] = conv_w(out_c, in_c, 1, 1)
                blk['down_bn'] = bn_p(out_c)
            blocks.append(blk)
            in_c = out_c
        params['layers'].append(blocks)
    params['fc'] = linear_p(2048, 256)
    params['head_lab'] = linear_p(256, 10)
    params['head_unl'] = linear_p(256, 4)
    return params


def _fold_conv(w, bn, cin_pad=None, cout_pad=None, eps=1e-5):
    """Fold inference BatchNorm into the conv weight; zero-pad Cin/Cout to the requested
    lane-dense widths; pack to (kh*kw*Cin_pad, Cout_pad) bf16 matmul layout."""
    cout, cin, kh, kw = w.shape
    scale = bn['gamma'] / jnp.sqrt(bn['var'] + eps)
    bias = bn['beta'] - bn['mean'] * scale
    wm = (w * scale[:, None, None, None]).transpose(2, 3, 1, 0)   # (kh, kw, Cin, Cout)
    cin_p = cin if cin_pad is None else cin_pad
    cout_p = cout if cout_pad is None else cout_pad
    if cin_p != cin or cout_p != cout:
        wm = jnp.pad(wm, ((0, 0), (0, 0), (0, cin_p - cin), (0, cout_p - cout)))
        bias = jnp.pad(bias, (0, cout_p - cout))
    wm = wm.reshape(kh * kw * cin_p, cout_p)
    return dict(w=wm.astype(jnp.bfloat16),
                b=bias.reshape(1, cout_p).astype(jnp.float32))


def _prep_linear(p):
    return dict(w=p['w'].T.astype(jnp.bfloat16),
                b=p['b'].reshape(1, -1).astype(jnp.float32))


def prepare_params(raw):
    """BN folding / matmul packing / lane padding / bf16 cast, ONCE outside the jit."""
    def cpad(c):
        return max(c, _LANE)

    p = dict(conv1=_fold_conv(raw['conv1'], raw['bn1'], cout_pad=cpad(64)), layers=[])
    ch = cpad(64)                     # effective channel count flowing into layer1
    for layer in raw['layers']:
        blocks = []
        for blk in layer:
            width = blk['conv1'].shape[0]
            out_c = blk['conv3'].shape[0]
            w_eff = cpad(width)
            nb = dict(
                conv1=_fold_conv(blk['conv1'], blk['bn1'], cin_pad=ch, cout_pad=w_eff),
                conv2=_fold_conv(blk['conv2'], blk['bn2'], cin_pad=w_eff, cout_pad=w_eff),
                conv3=_fold_conv(blk['conv3'], blk['bn3'], cin_pad=w_eff, cout_pad=out_c))
            if 'down_conv' in blk:
                down = _fold_conv(blk['down_conv'], blk['down_bn'],
                                  cin_pad=ch, cout_pad=out_c)
                # Fuse the downsample into conv3: combined bias at pack time, its weight
                # is consumed by the conv3 kernel's k==0 step.
                nb['conv3'] = dict(w=nb['conv3']['w'], b=nb['conv3']['b'] + down['b'])
                nb['down_w'] = down['w']
            blocks.append(nb)
            ch = out_c
        p['layers'].append(blocks)
    p['fc'] = _prep_linear(raw['fc'])
    # Fuse both heads into one (256, 14) matmul; logits are split afterwards.
    w_cat = jnp.concatenate([raw['head_lab']['w'].T, raw['head_unl']['w'].T], axis=1)
    b_cat = jnp.concatenate([raw['head_lab']['b'], raw['head_unl']['b']])
    p['heads'] = dict(w=w_cat.astype(jnp.bfloat16),
                      b=b_cat.reshape(1, -1).astype(jnp.float32))
    return p


def bottleneck(x, blk, stride):
    out = conv_bn(x, blk['conv1'], stride=1, relu=True)            # 1x1
    out = conv_bn(out, blk['conv2'], stride=stride, relu=True)     # 3x3 (stride here)
    if 'down_w' in blk:
        # Stage transition: downsample 1x1 conv fused into the conv3 kernel (k==0 step),
        # residual accumulated in f32, final ReLU in the epilogue.
        xs = x if stride == 1 else x[:, ::stride, ::stride, :]
        a_ds = xs.reshape(-1, xs.shape[-1])
        return conv_bn(out, blk['conv3'], stride=1, relu=True, ds=(a_ds, blk['down_w']))
    # Identity residual: added (f32) + ReLU fused into the conv3 matmul epilogue.
    return conv_bn(out, blk['conv3'], stride=1, relu=True, residual=x)


def model_forward(params, x):
    # NCHW (PyTorch interface) -> NHWC once; all activations flow NHWC in bf16.
    x = jnp.transpose(x, (0, 2, 3, 1)).astype(jnp.bfloat16)
    x = conv_bn(x, params['conv1'], stride=2, relu=True)           # 7x7/2 (Cout padded)
    # MaxPool2d(kernel=3, stride=2, padding=1) -- plain-JAX reduction (glue).
    x = lax.reduce_window(x, jnp.array(-jnp.inf, x.dtype), lax.max,
                          (1, 3, 3, 1), (1, 2, 2, 1),
                          ((0, 0), (1, 1), (1, 1), (0, 0)))
    for layer_params, (_, _, stride) in zip(params['layers'], _RESNET50_CFG):
        for bi, blk in enumerate(layer_params):
            x = bottleneck(x, blk, stride if bi == 0 else 1)
    feats = x.astype(jnp.float32).mean(axis=(1, 2))                # AdaptiveAvgPool2d
    logits = fc_heads(feats, params['fc'], params['heads'])        # fused fc+ReLU+heads
    return logits[:, :10], logits[:, 10:]


# ----------------------------------- main ----------------------------------------

if __name__ == "__main__":
    # Unit-check the fused matmul kernel (bf16 operands, f32 accumulate) vs. a JAX ref.
    ka, kb, kr, k1, k2, k3, k4 = jax.random.split(jax.random.PRNGKey(1), 7)
    at = jax.random.normal(ka, (37, 70), jnp.float32)
    bt = jax.random.normal(kb, (70, 19), jnp.float32)
    bias_t = (jnp.arange(19, dtype=jnp.float32) * 0.1).reshape(1, 19)
    rt = jax.random.normal(kr, (37, 19), jnp.float32)

    def _ref(a, b, bias, res=None, relu=False, ds=None):
        f32 = lambda t: t.astype(jnp.bfloat16).astype(jnp.float32)
        out = jnp.dot(f32(a), f32(b), precision=lax.Precision.HIGHEST) + bias
        if ds is not None:
            out = out + jnp.dot(f32(ds[0]), f32(ds[1]), precision=lax.Precision.HIGHEST)
        if res is not None:
            out = out + f32(res)
        return jnp.maximum(out, 0.0) if relu else out

    got = pallas_matmul(at, bt, bias_t, relu=True)
    np.testing.assert_allclose(np.asarray(got),
                               np.asarray(_ref(at, bt, bias_t, relu=True)),
                               rtol=1e-2, atol=1e-2)
    got_r = pallas_matmul(at, bt, bias_t, relu=True, residual=rt)
    np.testing.assert_allclose(np.asarray(got_r),
                               np.asarray(_ref(at, bt, bias_t, rt, relu=True)),
                               rtol=1e-2, atol=1e-2)
    # Fused downsample-branch path (used at every stage transition).
    a2 = jax.random.normal(k1, (64, 96), jnp.float32)
    b2 = jax.random.normal(k2, (96, 32), jnp.float32)
    ad = jax.random.normal(k3, (64, 48), jnp.float32)
    wd = jax.random.normal(k4, (48, 32), jnp.float32)
    bias2 = (jnp.arange(32, dtype=jnp.float32) * 0.05).reshape(1, 32)
    got_d = pallas_matmul(a2, b2, bias2, relu=True, ds=(ad, wd))
    np.testing.assert_allclose(np.asarray(got_d),
                               np.asarray(_ref(a2, b2, bias2, relu=True, ds=(ad, wd))),
                               rtol=1e-2, atol=1e-2)

    key = jax.random.PRNGKey(0)
    pkey, xkey = jax.random.split(key)
    params = prepare_params(init_params(pkey))     # BN fold / pack once, outside the jit
    x = jax.random.normal(xkey, (2, 3, 64, 64), jnp.float32)   # small NCHW image batch

    fwd = jax.jit(model_forward)
    lab_logits, unl_logits = fwd(params, x)
    jax.block_until_ready((lab_logits, unl_logits))

    assert lab_logits.shape == (2, 10), lab_logits.shape
    assert unl_logits.shape == (2, 4), unl_logits.shape
    assert bool(jnp.isfinite(lab_logits).all())
    assert bool(jnp.isfinite(unl_logits).all())
    print("KERNEL_OK")
</pallas_src>

<mosaic_0001>
module attributes {stable_mosaic.version = 11 : i64} {
  func.func @_matmul_kernel(%arg0: i32, %arg1: i32, %arg2: i32, %arg3: memref<40x70xbf16, #tpu.memory_space<vmem>>, %arg4: memref<70x19xbf16, #tpu.memory_space<vmem>>, %arg5: memref<1x19xf32, #tpu.memory_space<vmem>>, %arg6: memref<40x19xf32, #tpu.memory_space<vmem>>, %arg7: memref<40x19xf32, #tpu.memory_space<vmem>>) attributes {dimension_semantics = [#tpu.dimension_semantics<parallel>, #tpu.dimension_semantics<parallel>, #tpu.dimension_semantics<arbitrary>], iteration_bounds = array<i64: 1, 1, 1>, scalar_prefetch = 0 : i64, scratch_operands = 1 : i64, tpu.core_type = #tpu.core_type<tc>, window_params = [{transform_indices = @transform_0, window_bounds = array<i64: 40, 70>}, {transform_indices = @transform_1, window_bounds = array<i64: 70, 19>}, {transform_indices = @transform_2, window_bounds = array<i64: 1, 19>}, {transform_indices = @transform_3, window_bounds = array<i64: 40, 19>}]} {
    %c0_i32 = arith.constant 0 : i32
    %0 = arith.cmpi eq, %arg2, %c0_i32 : i32
    %1 = arith.extui %0 : i1 to i32
    %c0_i32_0 = arith.constant 0 : i32
    %2 = arith.cmpi ne, %1, %c0_i32_0 : i32
    scf.if %2 {
      %c0_10 = arith.constant 0 : index
      %c0_11 = arith.constant 0 : index
      %12 = vector.load %arg5[%c0_10, %c0_11] : memref<1x19xf32, #tpu.memory_space<vmem>>, vector<1x19xf32>
      %13 = vector.shape_cast %12 : vector<1x19xf32> to vector<1x19xf32>
      %14 = vector.broadcast %13 : vector<1x19xf32> to vector<40x19xf32>
      %c0_12 = arith.constant 0 : index
      %c0_13 = arith.constant 0 : index
      %15 = vector.load %arg7[%c0_12, %c0_13] : memref<40x19xf32, #tpu.memory_space<vmem>>, vector<40x19xf32>
      tpu.vector_store %arg7[%c0_12, %c0_13], %14 {strides = array<i32>} : memref<40x19xf32, #tpu.memory_space<vmem>>, vector<40x19xf32>,
    } else {
    }
    %c0 = arith.constant 0 : index
    %c0_1 = arith.constant 0 : index
    %3 = vector.load %arg7[%c0, %c0_1] : memref<40x19xf32, #tpu.memory_space<vmem>>, vector<40x19xf32>
    %c0_2 = arith.constant 0 : index
    %c0_3 = arith.constant 0 : index
    %4 = vector.load %arg3[%c0_2, %c0_3] : memref<40x70xbf16, #tpu.memory_space<vmem>>, vector<40x70xbf16>
    %c0_4 = arith.constant 0 : index
    %c0_5 = arith.constant 0 : index
    %5 = vector.load %arg4[%c0_4, %c0_5] : memref<70x19xbf16, #tpu.memory_space<vmem>>, vector<70x19xbf16>
    %cst = arith.constant dense<0.000000e+00> : vector<40x19xf32>
    %6 = tpu.matmul %4, %5, %cst {dimension_numbers = #tpu.dot_dimension_numbers<[1], [0], [0], [1], [0, 0, 1, 1], [], []>} : vector<40x70xbf16>, vector<70x19xbf16>, vector<40x19xf32> -> vector<40x19xf32>
    %7 = arith.addf %3, %6 : vector<40x19xf32>
    %c0_6 = arith.constant 0 : index
    %c0_7 = arith.constant 0 : index
    %8 = vector.load %arg7[%c0_6, %c0_7] : memref<40x19xf32, #tpu.memory_space<vmem>>, vector<40x19xf32>
    tpu.vector_store %arg7[%c0_6, %c0_7], %7 {strides = array<i32>} : memref<40x19xf32, #tpu.memory_space<vmem>>, vector<40x19xf32>,
    %c0_i32_8 = arith.constant 0 : i32
    %9 = arith.cmpi eq, %arg2, %c0_i32_8 : i32
    %10 = arith.extui %9 : i1 to i32
    %c0_i32_9 = arith.constant 0 : i32
    %11 = arith.cmpi ne, %10, %c0_i32_9 : i32
    scf.if %11 {
      %c0_10 = arith.constant 0 : index
      %c0_11 = arith.constant 0 : index
      %12 = vector.load %arg7[%c0_10, %c0_11] : memref<40x19xf32, #tpu.memory_space<vmem>>, vector<40x19xf32>
      %cst_12 = arith.constant 0.000000e+00 : f32
      %13 = vector.broadcast %cst_12 : f32 to vector<40x19xf32>
      %14 = arith.maximumf %12, %13 : vector<40x19xf32>
      %c0_13 = arith.constant 0 : index
      %c0_14 = arith.constant 0 : index
      %15 = vector.load %arg6[%c0_13, %c0_14] : memref<40x19xf32, #tpu.memory_space<vmem>>, vector<40x19xf32>
      tpu.vector_store %arg6[%c0_13, %c0_14], %14 {strides = array<i32>} : memref<40x19xf32, #tpu.memory_space<vmem>>, vector<40x19xf32>,
    } else {
    }
    return
  }
  func.func @transform_0(%arg0: i32, %arg1: i32, %arg2: i32) -> (i32, i32) {
    %c0_i32 = arith.constant 0 : i32
    return %arg0, %arg2 : i32, i32
  }
  func.func @transform_1(%arg0: i32, %arg1: i32, %arg2: i32) -> (i32, i32) {
    %c0_i32 = arith.constant 0 : i32
    return %arg2, %arg1 : i32, i32
  }
  func.func @transform_2(%arg0: i32, %arg1: i32, %arg2: i32) -> (i32, i32) {
    %c0_i32 = arith.constant 0 : i32
    %c0_i32_0 = arith.constant 0 : i32
    return %c0_i32, %arg1 : i32, i32
  }
  func.func @transform_3(%arg0: i32, %arg1: i32, %arg2: i32) -> (i32, i32) {
    %c0_i32 = arith.constant 0 : i32
    return %arg0, %arg1 : i32, i32
  }
}

</mosaic_0001>

<llo_original>
// kernel: tpu_custom_call.1
$region0: #{tpu_custom_call.1}
  #allocation0 [shape = 'u32[]', space=smem, size = 0x4, offset = 0x4, fixed_abs, tag = 'smem constant byte address 0x4 - core index']
  #allocation1 [shape = 'u32[144,128]{1,0:T(1,128)}', space=vmem, size = 0x12000, scoped, tag = 'internal scratch']
  #allocation2 [shape = 'f32[40,19]{1,0:T(8,128)}', space=vmem, size = 0x5000, scoped, tag = 'scratch operand']
  %s0 = inlined_call_operand.vmem [shape: bf16[40,70], index: 0, kind: input, shape index: {}]
  %s1 = inlined_call_operand.vmem [shape: bf16[70,19], index: 1, kind: input, shape index: {}]
  %s2 = inlined_call_operand.vmem [shape: f32[1,19], index: 2, kind: input, shape index: {}]
  %s3 = inlined_call_operand.vmem [shape: f32[40,19], index: 3, kind: output, shape index: {}]
  %s4 = sld [smem:[#allocation0]]
  $region30: #{tpu_custom_call.1} parent=0
    _
  %s6 = ssub.s32 1, %s4
  %s7 = scalar_select 0, %s6, %s4
  // Predicated region
  $region2: #{tpu_custom_call.1} parent=0 // pred_check
    _
  $region3: #{tpu_custom_call.1} parent=0 // pred_check_branch
    %9 = sbr.rel (0) target = $region5
  $region4: #{tpu_custom_call.1} parent=0 // pred_region
    _
  $region5: #{tpu_custom_call.1} parent=0 // pred_fallthru
    _
  // Predicated region
  $region6: #{tpu_custom_call.1} parent=0 // pred_check
    _
  $region7: #{tpu_custom_call.1} parent=0 // pred_check_branch
    %11 = sbr.rel (0) target = $region9
  $region8: #{tpu_custom_call.1} parent=0 // pred_region
    _
  $region9: #{tpu_custom_call.1} parent=0 // pred_fallthru
    _
  // Predicated region
  $region10: #{tpu_custom_call.1} parent=0 // pred_check
    _
  $region11: #{tpu_custom_call.1} parent=0 // pred_check_branch
    %13 = sbr.rel (0) target = $region13
  $region12: #{tpu_custom_call.1} parent=0 // pred_region
    _
  $region13: #{tpu_custom_call.1} parent=0 // pred_fallthru
    _
  %p15 = scmp.eq.s32.totalorder 0, 0
  // Predicated region
  $region14: #{tpu_custom_call.1} parent=0 // pred_check
    %p16 = pneg %p15
  $region15: #{tpu_custom_call.1} parent=0 // pred_check_branch
    %18 = sbr.rel (%p16) target = $region17
  $region16: #{tpu_custom_call.1} parent=0 // pred_region
    %v19 = vld [vmem:[%s2] sm:$0x1]
    %v21 = vlaneseq
    %v22 = vshrl.u32 %v21, 7
    %v23 = vsub.s32 0, %v22
    %v24 = vrot.slane %v19, %v23
    %vm26 = vcmask 154624
    %27 = vst.msk [vmem:[#allocation2] sm:$0xff] %vm26, %v24
    %28 = vst.msk [vmem:[#allocation2 + $0x8] sm:$0xff] %vm26, %v24
    %29 = vst.msk [vmem:[#allocation2 + $0x10] sm:$0xff] %vm26, %v24
    %30 = vst.msk [vmem:[#allocation2 + $0x18] sm:$0xff] %vm26, %v24
    %31 = vst.msk [vmem:[#allocation2 + $0x20] sm:$0xff] %vm26, %v24
  $region17: #{tpu_custom_call.1} parent=0 // pred_fallthru
    _
  %v32 = vld [vmem:[#allocation2] sm:$0xff]
  %v33 = vld [vmem:[#allocation2 + $0x8] sm:$0xff]
  %v34 = vld [vmem:[#allocation2 + $0x10] sm:$0xff]
  %v35 = vld [vmem:[#allocation2 + $0x18] sm:$0xff]
  %v36 = vld [vmem:[#allocation2 + $0x20] sm:$0xff]
  %v37 = vld [vmem:[%s0] sm:$0xf]
  %v38 = vld [vmem:[%s0 + $0x4] sm:$0xf]
  %v39 = vld [vmem:[%s0 + $0x8] sm:$0xf]
  %v40 = vld [vmem:[%s0 + $0xc] sm:$0xf]
  %v41 = vld [vmem:[%s0 + $0x10] sm:$0xf]
  %v42 = vld [vmem:[%s1] sm:$0xf]
  %v43 = vld [vmem:[%s1 + $0x4] sm:$0xf]
  %v44 = vld [vmem:[%s1 + $0x8] sm:$0xf]
  %v45 = vld [vmem:[%s1 + $0xc] sm:$0xf]
  %v46 = vld [vmem:[%s1 + $0x10] sm:$0xf]
  %v47 = vld [vmem:[%s1 + $0x14] sm:$0xf]
  %v48 = vld [vmem:[%s1 + $0x18] sm:$0xf]
  %v49 = vld [vmem:[%s1 + $0x1c] sm:$0xf]
  %v50 = vld [vmem:[%s1 + $0x20] sm:$0x7]
  %v56 = vunpack.c.l.b16 %v37
  %v57 = vunpack.c.l.b16 %v38
  %v58 = vunpack.c.l.b16 %v39
  %v59 = vunpack.c.l.b16 %v40
  %v60 = vunpack.c.l.b16 %v41
  %v61 = vpack.c.b16 %v57, %v56
  %v62 = vpack.c.b16 %v59, %v58
  %v63 = vpack.c.b16 %v60, %v60
  %v73 = vunpack.c.l.b16 %v42
  %v74 = vunpack.c.l.b16 %v43
  %v75 = vunpack.c.l.b16 %v44
  %v76 = vunpack.c.l.b16 %v45
  %v77 = vunpack.c.l.b16 %v46
  %v78 = vunpack.c.l.b16 %v47
  %v79 = vunpack.c.l.b16 %v48
  %v80 = vunpack.c.l.b16 %v49
  %v81 = vunpack.c.l.b16 %v50
  %v82 = vpack.c.b16 %v74, %v73
  %v83 = vpack.c.b16 %v76, %v75
  %v84 = vpack.c.b16 %v78, %v77
  %v85 = vpack.c.b16 %v80, %v79
  %v86 = vpack.c.b16 %v81, %v81
  %vm91 = vcmask 572416
  %v93 = vsel %vm91, %v61, 0
  %v96 = vsel %vm91, %v62, 0
  %v99 = vsel %vm91, %v63, 0
  %vm101 = vcmask 1042432
  %v103 = vsel %vm101, %v86, 0
  %105 = vmatprep.subr.bf16.mxu0 0
  %106 = vmatpush1.bf16.msra.mxu0 %v82
  %107 = vmatprep.subr.bf16.mxu0 0
  %108 = vmatpush1.bf16.msra.mxu0 %v83
  %109 = vmatprep.subr.bf16.mxu0 0
  %110 = vmatpush1.bf16.msra.mxu0 %v84
  %111 = vmatprep.subr.bf16.mxu0 0
  %112 = vmatpush1.bf16.msra.mxu0 %v85
  %113 = vmatprep.subr.bf16.mxu0 0
  %114 = vmatpush1.bf16.msra.mxu0 %v103
  %115 = vmatprep.subr.bf16.mxu0 0
  %116 = vmatpush1.bf16.msra.mxu0 0
  %117 = vmatprep.subr.bf16.mxu0 0
  %118 = vmatpush1.bf16.msra.mxu0 0
  %119 = vmatprep.subr.bf16.mxu0 0
  %120 = vmatpush1.bf16.msra.mxu0 0
  %121 = vmatprep.subr.bf16.mxu0 0
  %122 = vmatpush1.bf16.msra.mxu0 0
  %123 = vmatprep.subr.bf16.mxu0 0
  %124 = vmatpush1.bf16.msra.mxu0 0
  %125 = vmatprep.subr.bf16.mxu0 0
  %126 = vmatpush1.bf16.msra.mxu0 0
  %127 = vmatprep.subr.bf16.mxu0 0
  %128 = vmatpush1.bf16.msra.mxu0 0
  %129 = vmatprep.subr.bf16.mxu0 0
  %130 = vmatpush1.bf16.msra.mxu0 0
  %131 = vmatprep.subr.bf16.mxu0 0
  %132 = vmatpush1.bf16.msra.mxu0 0
  %133 = vmatprep.subr.bf16.mxu0 0
  %134 = vmatpush1.bf16.msra.mxu0 0
  %135 = vmatprep.subr.bf16.mxu0 0
  %136 = vmatpush1.bf16.msra.mxu0 0
  %137 = vmatprep.mubr.bf16.mxu0 0
  %138 = vmatmul.mubr.bf16.gmra.mrb[0].mxu0 %v93
  %v139 = vpop.f32.mrb[0].mxu0
  %v140 = vadd.f32 0.0, %v139
  %v141 = vpop.f32.mrb[0].mxu0
  %v142 = vpop.f32.mrb[0].mxu0
  %v143 = vadd.f32 0.0, %v142
  %v144 = vpop.f32.mrb[0].mxu0
  %145 = vmatprep.mubr.bf16.mxu0 0
  %146 = vmatmul.mubr.bf16.gmra.mrb[0].mxu0 %v96
  %v147 = vpop.f32.mrb[0].mxu0
  %v148 = vadd.f32 0.0, %v147
  %v149 = vpop.f32.mrb[0].mxu0
  %v150 = vpop.f32.mrb[0].mxu0
  %v151 = vadd.f32 0.0, %v150
  %v152 = vpop.f32.mrb[0].mxu0
  %153 = vmatprep.mubr.bf16.mxu0 0
  %154 = vmatmul.mubr.bf16.gmra.mrb[0].mxu0 %v99
  %v155 = vpop.f32.mrb[0].mxu0
  %v156 = vadd.f32 0.0, %v155
  %v157 = vpop.f32.mrb[0].mxu0
  %v158 = vpop.f32.mrb[0].mxu0
  %v159 = vpop.f32.mrb[0].mxu0
  %160 = vdwg.mxu0
  %v161 = vadd.f32 %v32, %v140
  %v162 = vadd.f32 %v33, %v143
  %v163 = vadd.f32 %v34, %v148
  %v164 = vadd.f32 %v35, %v151
  %v165 = vadd.f32 %v36, %v156
  %vm166 = vcmask 154624
  %167 = vst.msk [vmem:[#allocation2] sm:$0xff] %vm166, %v161
  %168 = vst.msk [vmem:[#allocation2 + $0x8] sm:$0xff] %vm166, %v162
  %169 = vst.msk [vmem:[#allocation2 + $0x10] sm:$0xff] %vm166, %v163
  %170 = vst.msk [vmem:[#allocation2 + $0x18] sm:$0xff] %vm166, %v164
  %171 = vst.msk [vmem:[#allocation2 + $0x20] sm:$0xff] %vm166, %v165
  // Predicated region
  $region18: #{tpu_custom_call.1} parent=0 // pred_check
    %p172 = pneg %p15
  $region19: #{tpu_custom_call.1} parent=0 // pred_check_branch
    %174 = sbr.rel (%p172) target = $region21
  $region20: #{tpu_custom_call.1} parent=0 // pred_region
    %v175 = vld [vmem:[#allocation2] sm:$0xff]
    %v176 = vld [vmem:[#allocation2 + $0x8] sm:$0xff]
    %v177 = vld [vmem:[#allocation2 + $0x10] sm:$0xff]
    %v178 = vld [vmem:[#allocation2 + $0x18] sm:$0xff]
    %v179 = vld [vmem:[#allocation2 + $0x20] sm:$0xff]
    %v180 = vmax.f32 %v175, 0.0
    %v181 = vmax.f32 %v176, 0.0
    %v182 = vmax.f32 %v177, 0.0
    %v183 = vmax.f32 %v178, 0.0
    %v184 = vmax.f32 %v179, 0.0
    %185 = vst.msk [vmem:[%s3] sm:$0xff] %vm166, %v180
    %186 = vst.msk [vmem:[%s3 + $0x8] sm:$0xff] %vm166, %v181
    %187 = vst.msk [vmem:[%s3 + $0x10] sm:$0xff] %vm166, %v182
    %188 = vst.msk [vmem:[%s3 + $0x18] sm:$0xff] %vm166, %v183
    %189 = vst.msk [vmem:[%s3 + $0x20] sm:$0xff] %vm166, %v184
  $region21: #{tpu_custom_call.1} parent=0 // pred_fallthru
    _
  // Predicated region
  $region22: #{tpu_custom_call.1} parent=0 // pred_check
    _
  $region23: #{tpu_custom_call.1} parent=0 // pred_check_branch
    %191 = sbr.rel (0) target = $region25
  $region24: #{tpu_custom_call.1} parent=0 // pred_region
    _
  $region25: #{tpu_custom_call.1} parent=0 // pred_fallthru
    _
  // Predicated region
  $region26: #{tpu_custom_call.1} parent=0 // pred_check
    _
  $region27: #{tpu_custom_call.1} parent=0 // pred_check_branch
    %193 = sbr.rel (0) target = $region29
  $region28: #{tpu_custom_call.1} parent=0 // pred_region
    _
  $region29: #{tpu_custom_call.1} parent=0 // pred_fallthru
    _

</llo_original>
